<compile_context>
chip_gen: v7x
topology: tpu7x:2x2x1
jax: 0.10.0
libtpu: 0.0.40
codegen_flags: <defaults>
</compile_context>

<pallas_src>
import functools

import jax
import jax.numpy as jnp
from jax import lax
from jax.experimental import pallas as pl
from jax.experimental.pallas import tpu as pltpu

H1, H2, H3 = 512, 256, 128
_COMPUTE_DTYPE = jnp.bfloat16  # MXU input dtype; accumulation is always f32


def _supports_single_buffering():
    """True if this JAX exposes BlockSpec(pipeline_mode=pl.Buffered(k))."""
    if not hasattr(pl, "Buffered"):
        return False
    try:
        pl.BlockSpec((8, 128), lambda i: (0, 0), pipeline_mode=pl.Buffered(1))
        return True
    except TypeError:
        return False


_SINGLE_BUFFER_WEIGHTS = _supports_single_buffering()


def _default_bf16_epilogue():
    """Use a bf16 bias/ReLU epilogue only on chips with a bf16 VPU (v6e/v7x)."""
    try:
        kind = jax.devices()[0].device_kind.lower()
    except Exception:
        return False
    return any(tag in kind for tag in ("v6", "v7", "7x"))


def _ranknet_kernel(x1_ref, x2_ref,
                    w1_ref, b1_ref, w2_ref, b2_ref, w3_ref, b3_ref,
                    w4t_ref, out_ref, *, bf16_epilogue):
    """Fused RankNet forward for one batch tile.

    Runs the shared 3-layer trunk once on [x1; x2] (concatenated along the
    batch/sublane axis), then applies the final linear layer to the difference
    of the two trunk outputs (its bias cancels) and a stable sigmoid, writing
    a lane-dense (1, block_b) row.
    """
    block_b = out_ref.shape[-1]
    cdt = _COMPUTE_DTYPE

    # One trunk pass over both documents: (2*block_b, F).  Concatenate in bf16
    # so the VMEM copy is half the size of an f32 concat.
    xc = jnp.concatenate(
        [x1_ref[...].astype(cdt), x2_ref[...].astype(cdt)], axis=0)

    def layer(x_cdt, w_ref, b_ref):
        acc = jnp.dot(x_cdt, w_ref[...], preferred_element_type=jnp.float32)
        if bf16_epilogue:
            # bf16 VPU (v6e/v7x): packs 2 elems/lane -> half the VALU ops.
            return jnp.maximum(acc.astype(cdt) + b_ref[...].astype(cdt), 0)
        # v5e: no bf16 VALU -> keep the epilogue in f32 (filler under the MXU).
        return jnp.maximum(acc + b_ref[...], 0.0).astype(cdt)

    h = layer(xc, w1_ref, b1_ref)
    h = layer(h, w2_ref, b2_ref)
    h = layer(h, w3_ref, b3_ref)                 # (2*block_b, H3), bf16

    # Last layer is linear -> its bias cancels in s1 - s2.  Contract so the
    # batch lands on the lane axis: (1, H3) . (block_b, H3)^T -> (1, block_b).
    d = h[:block_b, :] - h[block_b:, :]          # (block_b, H3), bf16
    diff = lax.dot_general(
        w4t_ref[...], d,
        dimension_numbers=(((1,), (1,)), ((), ())),
        preferred_element_type=jnp.float32)       # (1, block_b), f32

    # Numerically stable sigmoid (matches jax.nn.sigmoid semantics).
    pos = diff >= 0.0
    z = jnp.exp(jnp.where(pos, -diff, diff))
    prob = jnp.where(pos, 1.0 / (1.0 + z), z / (1.0 + z))

    out_ref[0] = prob.astype(out_ref.dtype)


def _round_up(x, m):
    return (x + m - 1) // m * m


def _replicated(a):
    """BlockSpec for a grid-invariant (weight/bias) operand."""
    nd = a.ndim
    idx = lambda i, _nd=nd: (0,) * _nd
    if _SINGLE_BUFFER_WEIGHTS:
        # Constant-index blocks never change -> single-buffer them to halve
        # their VMEM residency (matters most on v7x's 64 MiB VMEM).
        return pl.BlockSpec(a.shape, idx, pipeline_mode=pl.Buffered(1))
    return pl.BlockSpec(a.shape, idx)


def _vmem_limit_bytes(block_b, F, x_itemsize):
    """Per-step VMEM footprint estimate (2x margin), clamped for v7x headroom."""
    xt = 2 * block_b * F * x_itemsize * 2            # x1/x2 tiles, double buffered
    xc = 2 * block_b * F * 2                         # bf16 concat of both tiles
    wt = (F * H1 + H1 * H2 + H2 * H3 + H3) * 2       # bf16 weights
    bt = (H1 + H2 + H3) * 4                          # f32 biases
    act = 2 * block_b * (H1 + H2 + H3) * 4           # f32 upper bound on live acts
    out = 2 * block_b * 4
    est = xt + xc + wt + bt + act + out
    return int(min(max(2 * est, 16 * 2**20), 56 * 2**20))


def prepare_params(params):
    """Pre-cast weights to the MXU dtype and pre-transpose the scoring head.

    Call once and reuse: this removes the per-call HBM read of the f32 weights
    plus the write of their bf16 copies.
    """
    (w1, b1), (w2, b2), (w3, b3), (w4, _b4) = params
    cdt = _COMPUTE_DTYPE
    return (w1.astype(cdt), b1, w2.astype(cdt), b2, w3.astype(cdt), b3,
            jnp.transpose(w4).astype(cdt))           # b4 cancels in the diff


def ranknet_forward(x1, x2, params=None, *, prepared=None, block_b=None,
                    bf16_epilogue=None):
    """Pairwise RankNet forward: sigmoid(model(x1) - model(x2)).

    x1, x2: (B, F) float arrays (f32 or bf16; bf16 halves the per-step HBM
    reads, accuracy is unchanged since the kernel computes in bf16 anyway).
    Returns (B, 1) float32 probabilities.
    """
    B, F = x1.shape
    assert x2.shape == (B, F)
    if prepared is None:
        assert params is not None, "pass params or prepared=prepare_params(params)"
        prepared = prepare_params(params)
    w1c, b1, w2c, b2, w3c, b3, w4t = prepared
    if bf16_epilogue is None:
        bf16_epilogue = _default_bf16_epilogue()

    if block_b is None:
        if B >= 1024:
            # >= 2 grid steps so both v7x TensorCores get work, while keeping
            # >= 512-row tiles; multiple of 128 keeps the output lane-dense.
            block_b = min(1024, _round_up(pl.cdiv(B, 2), 128))
        else:
            block_b = _round_up(B, 8)
    block_b = max(8, _round_up(block_b, 8))
    # Ragged B: no padding copy -- the last block reads past the end (stale
    # rows) and its garbage outputs are sliced off below.
    num_tiles = pl.cdiv(B, block_b)

    x_spec = pl.BlockSpec((block_b, F), lambda i: (i, 0))

    grid_spec = pltpu.PrefetchScalarGridSpec(
        num_scalar_prefetch=0,
        grid=(num_tiles,),
        in_specs=[
            x_spec, x_spec,
            _replicated(w1c), _replicated(b1),
            _replicated(w2c), _replicated(b2),
            _replicated(w3c), _replicated(b3),
            _replicated(w4t),
        ],
        # Lane-dense output: one (1, block_b) row per grid step.
        out_specs=pl.BlockSpec((1, 1, block_b), lambda i: (i, 0, 0)),
    )

    out = pl.pallas_call(
        functools.partial(_ranknet_kernel, bf16_epilogue=bf16_epilogue),
        out_shape=jax.ShapeDtypeStruct((num_tiles, 1, block_b), jnp.float32),
        grid_spec=grid_spec,
        compiler_params=pltpu.CompilerParams(
            dimension_semantics=("parallel",),
            vmem_limit_bytes=_vmem_limit_bytes(block_b, F, x1.dtype.itemsize)),
    )(x1, x2, w1c, b1, w2c, b2, w3c, b3, w4t)

    return out.reshape(num_tiles * block_b, 1)[:B]


def init_params(key, num_features):
    """Deterministic init mimicking torch.nn.Linear default (U(-1/sqrt(fan_in), ..))."""
    dims = [(num_features, H1), (H1, H2), (H2, H3), (H3, 1)]
    params = []
    for (fan_in, fan_out) in dims:
        key, kw, kb = jax.random.split(key, 3)
        bound = 1.0 / jnp.sqrt(fan_in)
        w = jax.random.uniform(kw, (fan_in, fan_out), jnp.float32, -bound, bound)
        b = jax.random.uniform(kb, (1, fan_out), jnp.float32, -bound, bound)
        params.append((w, b))
    return params


def ranknet_reference_mixed(x1, x2, params, *, bf16_epilogue):
    """Pure-JAX reference mirroring the kernel's mixed-precision math."""
    (w1, b1), (w2, b2), (w3, b3), (w4, _b4) = params
    cdt = _COMPUTE_DTYPE

    def layer(x, w, b):
        acc = jnp.dot(x.astype(cdt), w.astype(cdt),
                      preferred_element_type=jnp.float32)
        if bf16_epilogue:
            return jnp.maximum(acc.astype(cdt) + b.astype(cdt), 0)
        return jnp.maximum(acc + b, 0.0).astype(cdt)

    def trunk(x):
        h = layer(x, w1, b1)
        h = layer(h, w2, b2)
        return layer(h, w3, b3)

    d = trunk(x1) - trunk(x2)                       # bf16, b4 cancels
    diff = jnp.dot(d, w4.astype(cdt), preferred_element_type=jnp.float32)
    return jax.nn.sigmoid(diff)


def ranknet_reference_f32(x1, x2, params):
    """Pure-f32 reference matching the original PyTorch module (eval mode)."""
    def mlp(x):
        h = x
        for i, (w, b) in enumerate(params):
            h = h @ w + b
            if i < len(params) - 1:
                h = jnp.maximum(h, 0.0)
        return h
    return jax.nn.sigmoid(mlp(x1) - mlp(x2))


if __name__ == "__main__":
    key = jax.random.PRNGKey(0)
    B, F = 8, 32  # small batch, num_features=32

    kp, k1, k2 = jax.random.split(key, 3)
    params = init_params(kp, F)
    prepared = prepare_params(params)       # hoisted weight cast (reused across calls)
    x1 = jax.random.normal(k1, (B, F), jnp.float32)
    x2 = jax.random.normal(k2, (B, F), jnp.float32)

    bf16_epi = _default_bf16_epilogue()
    prob = jax.block_until_ready(
        ranknet_forward(x1, x2, prepared=prepared, bf16_epilogue=bf16_epi))
    assert prob.shape == (B, 1)

    ref_mixed = ranknet_reference_mixed(x1, x2, params, bf16_epilogue=bf16_epi)
    ref_f32 = ranknet_reference_f32(x1, x2, params)
    assert jnp.allclose(prob, ref_mixed, atol=2e-3, rtol=0), (
        f"max abs err vs mixed-precision ref {jnp.max(jnp.abs(prob - ref_mixed))}")
    assert jnp.allclose(prob, ref_f32, atol=5e-2, rtol=0), (
        f"max abs err vs f32 ref {jnp.max(jnp.abs(prob - ref_f32))}")

    print("KERNEL_OK")
</pallas_src>

<mosaic_0001>
module attributes {stable_mosaic.version = 11 : i64} {
  func.func @_ranknet_kernel(%arg0: i32, %arg1: memref<8x32xf32, #tpu.memory_space<vmem>>, %arg2: memref<8x32xf32, #tpu.memory_space<vmem>>, %arg3: memref<32x512xbf16, #tpu.memory_space<vmem>>, %arg4: memref<1x512xf32, #tpu.memory_space<vmem>>, %arg5: memref<512x256xbf16, #tpu.memory_space<vmem>>, %arg6: memref<1x256xf32, #tpu.memory_space<vmem>>, %arg7: memref<256x128xbf16, #tpu.memory_space<vmem>>, %arg8: memref<1x128xf32, #tpu.memory_space<vmem>>, %arg9: memref<1x128xbf16, #tpu.memory_space<vmem>>, %arg10: memref<1x1x8xf32, #tpu.memory_space<vmem>>) attributes {dimension_semantics = [#tpu.dimension_semantics<parallel>], iteration_bounds = array<i64: 1>, scalar_prefetch = 0 : i64, scratch_operands = 0 : i64, tpu.core_type = #tpu.core_type<tc>, window_params = [{transform_indices = @transform_0, window_bounds = array<i64: 8, 32>}, {transform_indices = @transform_1, window_bounds = array<i64: 8, 32>}, {pipeline_mode = #tpu.pipeline_mode<synchronous>, transform_indices = @transform_2, window_bounds = array<i64: 32, 512>}, {pipeline_mode = #tpu.pipeline_mode<synchronous>, transform_indices = @transform_3, window_bounds = array<i64: 1, 512>}, {pipeline_mode = #tpu.pipeline_mode<synchronous>, transform_indices = @transform_4, window_bounds = array<i64: 512, 256>}, {pipeline_mode = #tpu.pipeline_mode<synchronous>, transform_indices = @transform_5, window_bounds = array<i64: 1, 256>}, {pipeline_mode = #tpu.pipeline_mode<synchronous>, transform_indices = @transform_6, window_bounds = array<i64: 256, 128>}, {pipeline_mode = #tpu.pipeline_mode<synchronous>, transform_indices = @transform_7, window_bounds = array<i64: 1, 128>}, {pipeline_mode = #tpu.pipeline_mode<synchronous>, transform_indices = @transform_8, window_bounds = array<i64: 1, 128>}, {transform_indices = @transform_9, window_bounds = array<i64: 1, 1, 8>}]} {
    %c0 = arith.constant 0 : index
    %c0_0 = arith.constant 0 : index
    %0 = vector.load %arg1[%c0, %c0_0] : memref<8x32xf32, #tpu.memory_space<vmem>>, vector<8x32xf32>
    %1 = arith.truncf %0 : vector<8x32xf32> to vector<8x32xbf16>
    %c0_1 = arith.constant 0 : index
    %c0_2 = arith.constant 0 : index
    %2 = vector.load %arg2[%c0_1, %c0_2] : memref<8x32xf32, #tpu.memory_space<vmem>>, vector<8x32xf32>
    %3 = arith.truncf %2 : vector<8x32xf32> to vector<8x32xbf16>
    %4 = tpu.concatenate %1, %3 in 0 : vector<8x32xbf16>, vector<8x32xbf16> -> vector<16x32xbf16>
    %c0_3 = arith.constant 0 : index
    %c0_4 = arith.constant 0 : index
    %5 = vector.load %arg3[%c0_3, %c0_4] : memref<32x512xbf16, #tpu.memory_space<vmem>>, vector<32x512xbf16>
    %cst = arith.constant dense<0.000000e+00> : vector<16x512xf32>
    %6 = tpu.matmul %4, %5, %cst {dimension_numbers = #tpu.dot_dimension_numbers<[1], [0], [0], [1], [0, 0, 1, 1], [], []>} : vector<16x32xbf16>, vector<32x512xbf16>, vector<16x512xf32> -> vector<16x512xf32>
    %c0_5 = arith.constant 0 : index
    %c0_6 = arith.constant 0 : index
    %7 = vector.load %arg4[%c0_5, %c0_6] : memref<1x512xf32, #tpu.memory_space<vmem>>, vector<1x512xf32>
    %8 = vector.broadcast %7 : vector<1x512xf32> to vector<16x512xf32>
    %9 = arith.addf %6, %8 : vector<16x512xf32>
    %cst_7 = arith.constant 0.000000e+00 : f32
    %10 = vector.broadcast %cst_7 : f32 to vector<16x512xf32>
    %11 = arith.maximumf %9, %10 : vector<16x512xf32>
    %12 = arith.truncf %11 : vector<16x512xf32> to vector<16x512xbf16>
    %c0_8 = arith.constant 0 : index
    %c0_9 = arith.constant 0 : index
    %13 = vector.load %arg5[%c0_8, %c0_9] : memref<512x256xbf16, #tpu.memory_space<vmem>>, vector<512x256xbf16>
    %cst_10 = arith.constant dense<0.000000e+00> : vector<16x256xf32>
    %14 = tpu.matmul %12, %13, %cst_10 {dimension_numbers = #tpu.dot_dimension_numbers<[1], [0], [0], [1], [0, 0, 1, 1], [], []>} : vector<16x512xbf16>, vector<512x256xbf16>, vector<16x256xf32> -> vector<16x256xf32>
    %c0_11 = arith.constant 0 : index
    %c0_12 = arith.constant 0 : index
    %15 = vector.load %arg6[%c0_11, %c0_12] : memref<1x256xf32, #tpu.memory_space<vmem>>, vector<1x256xf32>
    %16 = vector.broadcast %15 : vector<1x256xf32> to vector<16x256xf32>
    %17 = arith.addf %14, %16 : vector<16x256xf32>
    %cst_13 = arith.constant 0.000000e+00 : f32
    %18 = vector.broadcast %cst_13 : f32 to vector<16x256xf32>
    %19 = arith.maximumf %17, %18 : vector<16x256xf32>
    %20 = arith.truncf %19 : vector<16x256xf32> to vector<16x256xbf16>
    %c0_14 = arith.constant 0 : index
    %c0_15 = arith.constant 0 : index
    %21 = vector.load %arg7[%c0_14, %c0_15] : memref<256x128xbf16, #tpu.memory_space<vmem>>, vector<256x128xbf16>
    %cst_16 = arith.constant dense<0.000000e+00> : vector<16x128xf32>
    %22 = tpu.matmul %20, %21, %cst_16 {dimension_numbers = #tpu.dot_dimension_numbers<[1], [0], [0], [1], [0, 0, 1, 1], [], []>} : vector<16x256xbf16>, vector<256x128xbf16>, vector<16x128xf32> -> vector<16x128xf32>
    %c0_17 = arith.constant 0 : index
    %c0_18 = arith.constant 0 : index
    %23 = vector.load %arg8[%c0_17, %c0_18] : memref<1x128xf32, #tpu.memory_space<vmem>>, vector<1x128xf32>
    %24 = vector.broadcast %23 : vector<1x128xf32> to vector<16x128xf32>
    %25 = arith.addf %22, %24 : vector<16x128xf32>
    %cst_19 = arith.constant 0.000000e+00 : f32
    %26 = vector.broadcast %cst_19 : f32 to vector<16x128xf32>
    %27 = arith.maximumf %25, %26 : vector<16x128xf32>
    %28 = arith.truncf %27 : vector<16x128xf32> to vector<16x128xbf16>
    %29 = vector.extract_strided_slice %28 {offsets = [0, 0], sizes = [8, 128], strides = [1, 1]} : vector<16x128xbf16> to vector<8x128xbf16>
    %30 = vector.extract_strided_slice %28 {offsets = [8, 0], sizes = [8, 128], strides = [1, 1]} : vector<16x128xbf16> to vector<8x128xbf16>
    %31 = arith.subf %29, %30 : vector<8x128xbf16>
    %c0_20 = arith.constant 0 : index
    %c0_21 = arith.constant 0 : index
    %32 = vector.load %arg9[%c0_20, %c0_21] : memref<1x128xbf16, #tpu.memory_space<vmem>>, vector<1x128xbf16>
    %cst_22 = arith.constant dense<0.000000e+00> : vector<1x8xf32>
    %33 = tpu.matmul %32, %31, %cst_22 {dimension_numbers = #tpu.dot_dimension_numbers<[1], [1], [0], [0], [0, 0, 1, 0], [], []>} : vector<1x128xbf16>, vector<8x128xbf16>, vector<1x8xf32> -> vector<1x8xf32>
    %cst_23 = arith.constant 0.000000e+00 : f32
    %34 = vector.broadcast %cst_23 : f32 to vector<1x8xf32>
    %35 = arith.cmpf oge, %33, %34 : vector<1x8xf32>
    %cst_24 = arith.constant 0.000000e+00 : f32
    %36 = vector.broadcast %cst_24 : f32 to vector<1x8xf32>
    %37 = arith.subf %36, %33 : vector<1x8xf32>
    %38 = arith.select %35, %37, %33 : vector<1x8xi1>, vector<1x8xf32>
    %39 = math.exp %38 : vector<1x8xf32>
    %cst_25 = arith.constant 1.000000e+00 : f32
    %40 = vector.broadcast %cst_25 : f32 to vector<1x8xf32>
    %41 = arith.addf %40, %39 : vector<1x8xf32>
    %cst_26 = arith.constant 1.000000e+00 : f32
    %42 = vector.broadcast %cst_26 : f32 to vector<1x8xf32>
    %43 = arith.divf %42, %41 : vector<1x8xf32>
    %cst_27 = arith.constant 1.000000e+00 : f32
    %44 = vector.broadcast %cst_27 : f32 to vector<1x8xf32>
    %45 = arith.addf %44, %39 : vector<1x8xf32>
    %46 = arith.divf %39, %45 : vector<1x8xf32>
    %47 = arith.select %35, %43, %46 : vector<1x8xi1>, vector<1x8xf32>
    %c0_28 = arith.constant 0 : index
    %c0_29 = arith.constant 0 : index
    %c0_30 = arith.constant 0 : index
    %48 = vector.load %arg10[%c0_28, %c0_29, %c0_30] : memref<1x1x8xf32, #tpu.memory_space<vmem>>, vector<1x1x8xf32>
    %49 = vector.shape_cast %48 : vector<1x1x8xf32> to vector<1x8xf32>
    %50 = vector.shape_cast %47 : vector<1x8xf32> to vector<1x1x8xf32>
    tpu.vector_store %arg10[%c0_28, %c0_29, %c0_30], %50 {strides = array<i32>} : memref<1x1x8xf32, #tpu.memory_space<vmem>>, vector<1x1x8xf32>,
    return
  }
  func.func @transform_0(%arg0: i32) -> (i32, i32) {
    %c0_i32 = arith.constant 0 : i32
    %c0_i32_0 = arith.constant 0 : i32
    return %arg0, %c0_i32 : i32, i32
  }
  func.func @transform_1(%arg0: i32) -> (i32, i32) {
    %c0_i32 = arith.constant 0 : i32
    %c0_i32_0 = arith.constant 0 : i32
    return %arg0, %c0_i32 : i32, i32
  }
  func.func @transform_2(%arg0: i32) -> (i32, i32) {
    %c0_i32 = arith.constant 0 : i32
    %c0_i32_0 = arith.constant 0 : i32
    %c0_i32_1 = arith.constant 0 : i32
    return %c0_i32, %c0_i32_0 : i32, i32
  }
  func.func @transform_3(%arg0: i32) -> (i32, i32) {
    %c0_i32 = arith.constant 0 : i32
    %c0_i32_0 = arith.constant 0 : i32
    %c0_i32_1 = arith.constant 0 : i32
    return %c0_i32, %c0_i32_0 : i32, i32
  }
  func.func @transform_4(%arg0: i32) -> (i32, i32) {
    %c0_i32 = arith.constant 0 : i32
    %c0_i32_0 = arith.constant 0 : i32
    %c0_i32_1 = arith.constant 0 : i32
    return %c0_i32, %c0_i32_0 : i32, i32
  }
  func.func @transform_5(%arg0: i32) -> (i32, i32) {
    %c0_i32 = arith.constant 0 : i32
    %c0_i32_0 = arith.constant 0 : i32
    %c0_i32_1 = arith.constant 0 : i32
    return %c0_i32, %c0_i32_0 : i32, i32
  }
  func.func @transform_6(%arg0: i32) -> (i32, i32) {
    %c0_i32 = arith.constant 0 : i32
    %c0_i32_0 = arith.constant 0 : i32
    %c0_i32_1 = arith.constant 0 : i32
    return %c0_i32, %c0_i32_0 : i32, i32
  }
  func.func @transform_7(%arg0: i32) -> (i32, i32) {
    %c0_i32 = arith.constant 0 : i32
    %c0_i32_0 = arith.constant 0 : i32
    %c0_i32_1 = arith.constant 0 : i32
    return %c0_i32, %c0_i32_0 : i32, i32
  }
  func.func @transform_8(%arg0: i32) -> (i32, i32) {
    %c0_i32 = arith.constant 0 : i32
    %c0_i32_0 = arith.constant 0 : i32
    %c0_i32_1 = arith.constant 0 : i32
    return %c0_i32, %c0_i32_0 : i32, i32
  }
  func.func @transform_9(%arg0: i32) -> (i32, i32, i32) {
    %c0_i32 = arith.constant 0 : i32
    %c0_i32_0 = arith.constant 0 : i32
    %c0_i32_1 = arith.constant 0 : i32
    return %arg0, %c0_i32, %c0_i32_0 : i32, i32, i32
  }
}

</mosaic_0001>

<llo_original>
// kernel: tpu_custom_call.1
$region0: #{tpu_custom_call.1}
  #allocation0 [shape = 'u32[]', space=smem, size = 0x4, offset = 0x4, fixed_abs, tag = 'smem constant byte address 0x4 - core index']
  #allocation1 [shape = 'u32[144,128]{1,0:T(1,128)}', space=vmem, size = 0x12000, scoped, tag = 'internal scratch']
  %s0 = inlined_call_operand.hbm [shape: f32[8,32], index: 0, kind: input, shape index: {}]
  %s1 = inlined_call_operand.hbm [shape: f32[8,32], index: 1, kind: input, shape index: {}]
  %s2 = inlined_call_operand.hbm [shape: bf16[32,512], index: 2, kind: input, shape index: {}]
  %s3 = inlined_call_operand.vmem [shape: f32[1,512], index: 3, kind: input, shape index: {}]
  %s4 = inlined_call_operand.hbm [shape: bf16[512,256], index: 4, kind: input, shape index: {}]
  %s5 = inlined_call_operand.vmem [shape: f32[1,256], index: 5, kind: input, shape index: {}]
  %s6 = inlined_call_operand.hbm [shape: bf16[256,128], index: 6, kind: input, shape index: {}]
  %s7 = inlined_call_operand.vmem [shape: f32[1,128], index: 7, kind: input, shape index: {}]
  %s8 = inlined_call_operand.vmem [shape: bf16[1,128], index: 8, kind: input, shape index: {}]
  %s9 = inlined_call_operand.hbm [shape: f32[1,1,8], index: 9, kind: output, shape index: {}]
  %s10 = sld [smem:[#allocation0]]
  $region66: #{tpu_custom_call.1} parent=0
    _
  %s12 = ssub.s32 1, %s10
  %s13 = scalar_select 0, %s12, %s10
  $region1: #{tpu_custom_call.1} parent=0
    #allocation2 [shape = 'u8[4096]{0}', space=vmem, size = 0x1000, scoped, tag = 'input window, operand 0, single buffered']
    #allocation3 [shape = 's32[1]{0}', space=sflag, size = 0x4, scoped, tag = 'scoped memory for tpu_custom_call.1']
    #allocation4 [shape = 's32[1]{0}', space=sflag, size = 0x4, scoped, tag = 'scoped memory for tpu_custom_call.1']
    #allocation5 [shape = 'u8[4096]{0}', space=vmem, size = 0x1000, scoped, tag = 'input window, operand 1, single buffered']
    #allocation6 [shape = 's32[1]{0}', space=sflag, size = 0x4, scoped, tag = 'scoped memory for tpu_custom_call.1']
    #allocation7 [shape = 'u8[32768]{0}', space=vmem, size = 0x8000, scoped, tag = 'input window, operand 2, single buffered']
    #allocation8 [shape = 'u8[262144]{0}', space=vmem, size = 0x40000, scoped, tag = 'input window, operand 4, single buffered']
    #allocation9 [shape = 's32[1]{0}', space=sflag, size = 0x4, scoped, tag = 'scoped memory for tpu_custom_call.1']
    #allocation10 [shape = 'u8[65536]{0}', space=vmem, size = 0x10000, scoped, tag = 'input window, operand 6, single buffered']
    #allocation11 [shape = 'u8[512]{0}', space=vmem, size = 0x400, scoped, tag = 'output window, operand 0, single buffered']
    %14 = vsyncpa [#allocation3], 0
    %15 = vsyncpa [#allocation6], 0
    %16 = vsyncpa [#allocation9], 0
    %17 = vsyncpa [#allocation4], 0
    // Predicated region
    $region2: #{tpu_custom_call.1} parent=1 // pred_check
      _
    $region3: #{tpu_custom_call.1} parent=1 // pred_check_branch
      %19 = sbr.rel (0) target = $region5
    $region4: #{tpu_custom_call.1} parent=1 // pred_region
      %s21 = ssub.s32 128, 128
      %22 = vsyncadd [#allocation3], %s21
      %s24 = sshll.u32 [#allocation2], 4
      %s25 = int_to_ptr.vmem [resolvable:$true] %s24
      %27 = dma.hbm_to_vmem [thread:$0]  %s0, 128, %s25, [#allocation3]
    $region5: #{tpu_custom_call.1} parent=1 // pred_fallthru
      _
    // Predicated region
    $region6: #{tpu_custom_call.1} parent=1 // pred_check
      _
    $region7: #{tpu_custom_call.1} parent=1 // pred_check_branch
      %29 = sbr.rel (0) target = $region9
    $region8: #{tpu_custom_call.1} parent=1 // pred_region
      %s31 = ssub.s32 128, 128
      %32 = vsyncadd [#allocation6], %s31
      %s34 = sshll.u32 [#allocation5], 4
      %s35 = int_to_ptr.vmem [resolvable:$true] %s34
      %37 = dma.hbm_to_vmem [thread:$0]  %s1, 128, %s35, [#allocation6]
    $region9: #{tpu_custom_call.1} parent=1 // pred_fallthru
      _
    // Predicated region
    $region10: #{tpu_custom_call.1} parent=1 // pred_check
      _
    $region11: #{tpu_custom_call.1} parent=1 // pred_check_branch
      %39 = sbr.rel (0) target = $region13
    $region12: #{tpu_custom_call.1} parent=1 // pred_region
      %s41 = ssub.s32 1024, 1024
      %42 = vsyncadd [#allocation6], %s41
      %s43 = sshll.u32 [#allocation7], 4
      %s44 = int_to_ptr.vmem [resolvable:$true] %s43
      %49 = dma.hbm_to_vmem [thread:$0]  %s2, 1024, %s44, [#allocation6], 256, 256, 16
    $region13: #{tpu_custom_call.1} parent=1 // pred_fallthru
      _
    // Predicated region
    $region14: #{tpu_custom_call.1} parent=1 // pred_check
      _
    $region15: #{tpu_custom_call.1} parent=1 // pred_check_branch
      %51 = sbr.rel (0) target = $region17
    $region16: #{tpu_custom_call.1} parent=1 // pred_region
      _
    $region17: #{tpu_custom_call.1} parent=1 // pred_fallthru
      _
    // Predicated region
    $region18: #{tpu_custom_call.1} parent=1 // pred_check
      _
    $region19: #{tpu_custom_call.1} parent=1 // pred_check_branch
      %53 = sbr.rel (0) target = $region21
    $region20: #{tpu_custom_call.1} parent=1 // pred_region
      %s55 = ssub.s32 8192, 8192
      %56 = vsyncadd [#allocation9], %s55
      %s57 = sshll.u32 [#allocation8], 4
      %s58 = int_to_ptr.vmem [resolvable:$true] %s57
      %63 = dma.hbm_to_vmem [thread:$0]  %s4, 8192, %s58, [#allocation9], 128, 128, 8
    $region21: #{tpu_custom_call.1} parent=1 // pred_fallthru
      _
    // Predicated region
    $region22: #{tpu_custom_call.1} parent=1 // pred_check
      _
    $region23: #{tpu_custom_call.1} parent=1 // pred_check_branch
      %65 = sbr.rel (0) target = $region25
    $region24: #{tpu_custom_call.1} parent=1 // pred_region
      _
    $region25: #{tpu_custom_call.1} parent=1 // pred_fallthru
      _
    // Predicated region
    $region26: #{tpu_custom_call.1} parent=1 // pred_check
      _
    $region27: #{tpu_custom_call.1} parent=1 // pred_check_branch
      %67 = sbr.rel (0) target = $region29
    $region28: #{tpu_custom_call.1} parent=1 // pred_region
      %s69 = ssub.s32 2048, 2048
      %70 = vsyncadd [#allocation9], %s69
      %s71 = sshll.u32 [#allocation10], 4
      %s72 = int_to_ptr.vmem [resolvable:$true] %s71
      %77 = dma.hbm_to_vmem [thread:$0]  %s6, 2048, %s72, [#allocation9], 64, 64, 4
    $region29: #{tpu_custom_call.1} parent=1 // pred_fallthru
      _
    // Predicated region
    $region30: #{tpu_custom_call.1} parent=1 // pred_check
      _
    $region31: #{tpu_custom_call.1} parent=1 // pred_check_branch
      %79 = sbr.rel (0) target = $region33
    $region32: #{tpu_custom_call.1} parent=1 // pred_region
      _
    $region33: #{tpu_custom_call.1} parent=1 // pred_fallthru
      _
    // Predicated region
    $region34: #{tpu_custom_call.1} parent=1 // pred_check
      _
    $region35: #{tpu_custom_call.1} parent=1 // pred_check_branch
      %81 = sbr.rel (0) target = $region37
    $region36: #{tpu_custom_call.1} parent=1 // pred_region
      _
    $region37: #{tpu_custom_call.1} parent=1 // pred_fallthru
      _
    // Predicated region
    $region38: #{tpu_custom_call.1} parent=1 // pred_check
      _
    $region39: #{tpu_custom_call.1} parent=1 // pred_check_branch
      %83 = sbr.rel (0) target = $region41
    $region40: #{tpu_custom_call.1} parent=1 // pred_region
      %84 = dma.done [#allocation3], 128
    $region41: #{tpu_custom_call.1} parent=1 // pred_fallthru
      _
    // Predicated region
    $region42: #{tpu_custom_call.1} parent=1 // pred_check
      _
    $region43: #{tpu_custom_call.1} parent=1 // pred_check_branch
      %86 = sbr.rel (0) target = $region45
    $region44: #{tpu_custom_call.1} parent=1 // pred_region
      %87 = dma.done [#allocation6], 128
    $region45: #{tpu_custom_call.1} parent=1 // pred_fallthru
      _
    // Predicated region
    $region46: #{tpu_custom_call.1} parent=1 // pred_check
      _
    $region47: #{tpu_custom_call.1} parent=1 // pred_check_branch
      %89 = sbr.rel (0) target = $region49
    $region48: #{tpu_custom_call.1} parent=1 // pred_region
      %90 = dma.done [#allocation6], 1024
    $region49: #{tpu_custom_call.1} parent=1 // pred_fallthru
      _
    // Predicated region
    $region50: #{tpu_custom_call.1} parent=1 // pred_check
      _
    $region51: #{tpu_custom_call.1} parent=1 // pred_check_branch
      %92 = sbr.rel (0) target = $region53
    $region52: #{tpu_custom_call.1} parent=1 // pred_region
      %93 = dma.done [#allocation9], 8192
    $region53: #{tpu_custom_call.1} parent=1 // pred_fallthru
      _
    // Predicated region
    $region54: #{tpu_custom_call.1} parent=1 // pred_check
      _
    $region55: #{tpu_custom_call.1} parent=1 // pred_check_branch
      %95 = sbr.rel (0) target = $region57
    $region56: #{tpu_custom_call.1} parent=1 // pred_region
      %96 = dma.done [#allocation9], 2048
    $region57: #{tpu_custom_call.1} parent=1 // pred_fallthru
      _
    %v98 = vld [vmem:[#allocation2] sm:$0xff]
    %v99 = vpack.c.bf16 %v98, %v98
    %v100 = vld [vmem:[#allocation5] sm:$0xff]
    %v101 = vpack.c.bf16 %v100, %v100
    %v103 = vrot.slane %v101, 4
    %vm104 = vcmask 1043456
    %v107 = vsel %vm104, %v99, %v103
    %v108 = vld [vmem:[#allocation7] sm:$0xff]
    %v109 = vld [vmem:[#allocation7 + $0x8] sm:$0xff]
    %v110 = vld [vmem:[#allocation7 + $0x10] sm:$0xff]
    %v111 = vld [vmem:[#allocation7 + $0x18] sm:$0xff]
    %v112 = vld [vmem:[#allocation7 + $0x20] sm:$0xff]
    %v113 = vld [vmem:[#allocation7 + $0x28] sm:$0xff]
    %v114 = vld [vmem:[#allocation7 + $0x30] sm:$0xff]
    %v115 = vld [vmem:[#allocation7 + $0x38] sm:$0xff]
    %v116 = vld [vmem:[%s3] sm:$0xf]
    %v118 = vlaneseq
    %v119 = vshrl.u32 %v118, 7
    %v120 = vsub.s32 0, %v119
    %v121 = vrot.slane %v116, %v120
    %v122 = vlaneseq
    %v123 = vshrl.u32 %v122, 7
    %v124 = vsub.s32 1, %v123
    %v125 = vrot.slane %v116, %v124
    %v126 = vlaneseq
    %v127 = vshrl.u32 %v126, 7
    %v128 = vsub.s32 2, %v127
    %v129 = vrot.slane %v116, %v128
    %v130 = vlaneseq
    %v131 = vshrl.u32 %v130, 7
    %v132 = vsub.s32 3, %v131
    %v133 = vrot.slane %v116, %v132
    %v146 = vunpack.c.l.b16 %v108
    %v147 = vunpack.c.h.b16 %v108
    %v148 = vunpack.c.l.b16 %v109
    %v149 = vunpack.c.h.b16 %v109
    %v150 = vunpack.c.l.b16 %v110
    %v151 = vunpack.c.h.b16 %v110
    %v152 = vunpack.c.l.b16 %v111
    %v153 = vunpack.c.h.b16 %v111
    %v154 = vunpack.c.l.b16 %v112
    %v155 = vunpack.c.h.b16 %v112
    %v156 = vunpack.c.l.b16 %v113
    %v157 = vunpack.c.h.b16 %v113
    %v158 = vunpack.c.l.b16 %v114
    %v159 = vunpack.c.h.b16 %v114
    %v160 = vunpack.c.l.b16 %v115
    %v161 = vunpack.c.h.b16 %v115
    %v162 = vpack.c.b16 %v150, %v146
    %v163 = vpack.c.b16 %v151, %v147
    %v164 = vpack.c.b16 %v152, %v148
    %v165 = vpack.c.b16 %v153, %v149
    %v166 = vpack.c.b16 %v158, %v154
    %v167 = vpack.c.b16 %v159, %v155
    %v168 = vpack.c.b16 %v160, %v156
    %v169 = vpack.c.b16 %v161, %v157
    %vm178 = vcmask 261120
    %v179 = vsel %vm178, %v107, 0
    %181 = vmatprep.subr.bf16.mxu0 %v163
    %182 = vmatpush1.bf16.msra.mxu0 %v162
    %183 = vmatprep.subr.bf16.mxu0 %v167
    %184 = vmatpush1.bf16.msra.mxu0 %v166
    %185 = vmatprep.subr.bf16.mxu0 0
    %186 = vmatpush1.bf16.msra.mxu0 0
    %187 = vmatprep.subr.bf16.mxu0 0
    %188 = vmatpush1.bf16.msra.mxu0 0
    %189 = vmatprep.subr.bf16.mxu0 0
    %190 = vmatpush1.bf16.msra.mxu0 0
    %191 = vmatprep.subr.bf16.mxu0 0
    %192 = vmatpush1.bf16.msra.mxu0 0
    %193 = vmatprep.subr.bf16.mxu0 0
    %194 = vmatpush1.bf16.msra.mxu0 0
    %195 = vmatprep.subr.bf16.mxu0 0
    %196 = vmatpush1.bf16.msra.mxu0 0
    %197 = vmatprep.subr.bf16.mxu0 0
    %198 = vmatpush1.bf16.msra.mxu0 0
    %199 = vmatprep.subr.bf16.mxu0 0
    %200 = vmatpush1.bf16.msra.mxu0 0
    %201 = vmatprep.subr.bf16.mxu0 0
    %202 = vmatpush1.bf16.msra.mxu0 0
    %203 = vmatprep.subr.bf16.mxu0 0
    %204 = vmatpush1.bf16.msra.mxu0 0
    %205 = vmatprep.subr.bf16.mxu0 0
    %206 = vmatpush1.bf16.msra.mxu0 0
    %207 = vmatprep.subr.bf16.mxu0 0
    %208 = vmatpush1.bf16.msra.mxu0 0
    %209 = vmatprep.subr.bf16.mxu0 0
    %210 = vmatpush1.bf16.msra.mxu0 0
    %211 = vmatprep.subr.bf16.mxu0 0
    %212 = vmatpush1.bf16.msra.mxu0 0
    %213 = vmatprep.mubr.bf16.mxu0 0
    %214 = vmatmul.mubr.bf16.gmra.mrb[0].mxu0 %v179
    %v215 = vpop.f32.mrb[0].mxu0
    %v216 = vadd.f32 %v121, %v215
    %v217 = vpop.f32.mrb[0].mxu0
    %v218 = vadd.f32 %v125, %v217
    %v219 = vpop.f32.mrb[0].mxu0
    %v220 = vadd.f32 %v121, %v219
    %v221 = vpop.f32.mrb[0].mxu0
    %v222 = vadd.f32 %v125, %v221
    %223 = vdwg.mxu0
    %224 = vmatprep.subr.bf16.mxu0 %v165
    %225 = vmatpush1.bf16.msra.mxu0 %v164
    %226 = vmatprep.subr.bf16.mxu0 %v169
    %227 = vmatpush1.bf16.msra.mxu0 %v168
    %228 = vmatprep.subr.bf16.mxu0 0
    %229 = vmatpush1.bf16.msra.mxu0 0
    %230 = vmatprep.subr.bf16.mxu0 0
    %231 = vmatpush1.bf16.msra.mxu0 0
    %232 = vmatprep.subr.bf16.mxu0 0
    %233 = vmatpush1.bf16.msra.mxu0 0
    %234 = vmatprep.subr.bf16.mxu0 0
    %235 = vmatpush1.bf16.msra.mxu0 0
    %236 = vmatprep.subr.bf16.mxu0 0
    %237 = vmatpush1.bf16.msra.mxu0 0
    %238 = vmatprep.subr.bf16.mxu0 0
    %239 = vmatpush1.bf16.msra.mxu0 0
    %240 = vmatprep.subr.bf16.mxu0 0
    %241 = vmatpush1.bf16.msra.mxu0 0
    %242 = vmatprep.subr.bf16.mxu0 0
    %243 = vmatpush1.bf16.msra.mxu0 0
    %244 = vmatprep.subr.bf16.mxu0 0
    %245 = vmatpush1.bf16.msra.mxu0 0
    %246 = vmatprep.subr.bf16.mxu0 0
    %247 = vmatpush1.bf16.msra.mxu0 0
    %248 = vmatprep.subr.bf16.mxu0 0
    %249 = vmatpush1.bf16.msra.mxu0 0
    %250 = vmatprep.subr.bf16.mxu0 0
    %251 = vmatpush1.bf16.msra.mxu0 0
    %252 = vmatprep.subr.bf16.mxu0 0
    %253 = vmatpush1.bf16.msra.mxu0 0
    %254 = vmatprep.subr.bf16.mxu0 0
    %255 = vmatpush1.bf16.msra.mxu0 0
    %256 = vmatprep.mubr.bf16.mxu0 0
    %257 = vmatmul.mubr.bf16.gmra.mrb[0].mxu0 %v179
    %v258 = vpop.f32.mrb[0].mxu0
    %v259 = vadd.f32 %v129, %v258
    %v260 = vpop.f32.mrb[0].mxu0
    %v261 = vadd.f32 %v133, %v260
    %v262 = vpop.f32.mrb[0].mxu0
    %v263 = vadd.f32 %v129, %v262
    %v264 = vpop.f32.mrb[0].mxu0
    %v265 = vadd.f32 %v133, %v264
    %266 = vdwg.mxu0
    %v267 = vmax.f32 %v216, 0.0
    %v268 = vmax.f32 %v218, 0.0
    %v269 = vmax.f32 %v259, 0.0
    %v270 = vmax.f32 %v261, 0.0
    %v271 = vmax.f32 %v220, 0.0
    %v272 = vmax.f32 %v222, 0.0
    %v273 = vmax.f32 %v263, 0.0
    %v274 = vmax.f32 %v265, 0.0
    %v275 = vpack.c.bf16 %v271, %v267
    %v276 = vpack.c.bf16 %v272, %v268
    %v277 = vpack.c.bf16 %v273, %v269
    %v278 = vpack.c.bf16 %v274, %v270
    %v279 = vld [vmem:[#allocation8] sm:$0xff]
    %v280 = vld [vmem:[#allocation8 + $0x8] sm:$0xff]
    %v281 = vld [vmem:[#allocation8 + $0x10] sm:$0xff]
    %v282 = vld [vmem:[#allocation8 + $0x18] sm:$0xff]
    %v283 = vld [vmem:[#allocation8 + $0x20] sm:$0xff]
    %v284 = vld [vmem:[#allocation8 + $0x28] sm:$0xff]
    %v285 = vld [vmem:[#allocation8 + $0x30] sm:$0xff]
    %v286 = vld [vmem:[#allocation8 + $0x38] sm:$0xff]
    %v287 = vld [vmem:[#allocation8 + $0x40] sm:$0xff]
    %v288 = vld [vmem:[#allocation8 + $0x48] sm:$0xff]
    %v289 = vld [vmem:[#allocation8 + $0x50] sm:$0xff]
    %v290 = vld [vmem:[#allocation8 + $0x58] sm:$0xff]
    %v291 = vld [vmem:[#allocation8 + $0x60] sm:$0xff]
    %v292 = vld [vmem:[#allocation8 + $0x68] sm:$0xff]
    %v293 = vld [vmem:[#allocation8 + $0x70] sm:$0xff]
    %v294 = vld [vmem:[#allocation8 + $0x78] sm:$0xff]
    %v295 = vld [vmem:[#allocation8 + $0x80] sm:$0xff]
    %v296 = vld [vmem:[#allocation8 + $0x88] sm:$0xff]
    %v297 = vld [vmem:[#allocation8 + $0x90] sm:$0xff]
    %v298 = vld [vmem:[#allocation8 + $0x98] sm:$0xff]
    %v299 = vld [vmem:[#allocation8 + $0xa0] sm:$0xff]
    %v300 = vld [vmem:[#allocation8 + $0xa8] sm:$0xff]
    %v301 = vld [vmem:[#allocation8 + $0xb0] sm:$0xff]
    %v302 = vld [vmem:[#allocation8 + $0xb8] sm:$0xff]
    %v303 = vld [vmem:[#allocation8 + $0xc0] sm:$0xff]
    %v304 = vld [vmem:[#allocation8 + $0xc8] sm:$0xff]
    %v305 = vld [vmem:[#allocation8 + $0xd0] sm:$0xff]
    %v306 = vld [vmem:[#allocation8 + $0xd8] sm:$0xff]
    %v307 = vld [vmem:[#allocation8 + $0xe0] sm:$0xff]
    %v308 = vld [vmem:[#allocation8 + $0xe8] sm:$0xff]
    %v309 = vld [vmem:[#allocation8 + $0xf0] sm:$0xff]
    %v310 = vld [vmem:[#allocation8 + $0xf8] sm:$0xff]
    %v311 = vld [vmem:[#allocation8 + $0x100] sm:$0xff]
    %v312 = vld [vmem:[#allocation8 + $0x108] sm:$0xff]
    %v313 = vld [vmem:[#allocation8 + $0x110] sm:$0xff]
    %v314 = vld [vmem:[#allocation8 + $0x118] sm:$0xff]
    %v315 = vld [vmem:[#allocation8 + $0x120] sm:$0xff]
    %v316 = vld [vmem:[#allocation8 + $0x128] sm:$0xff]
    %v317 = vld [vmem:[#allocation8 + $0x130] sm:$0xff]
    %v318 = vld [vmem:[#allocation8 + $0x138] sm:$0xff]
    %v319 = vld [vmem:[#allocation8 + $0x140] sm:$0xff]
    %v320 = vld [vmem:[#allocation8 + $0x148] sm:$0xff]
    %v321 = vld [vmem:[#allocation8 + $0x150] sm:$0xff]
    %v322 = vld [vmem:[#allocation8 + $0x158] sm:$0xff]
    %v323 = vld [vmem:[#allocation8 + $0x160] sm:$0xff]
    %v324 = vld [vmem:[#allocation8 + $0x168] sm:$0xff]
    %v325 = vld [vmem:[#allocation8 + $0x170] sm:$0xff]
    %v326 = vld [vmem:[#allocation8 + $0x178] sm:$0xff]
    %v327 = vld [vmem:[#allocation8 + $0x180] sm:$0xff]
    %v328 = vld [vmem:[#allocation8 + $0x188] sm:$0xff]
    %v329 = vld [vmem:[#allocation8 + $0x190] sm:$0xff]
    %v330 = vld [vmem:[#allocation8 + $0x198] sm:$0xff]
    %v331 = vld [vmem:[#allocation8 + $0x1a0] sm:$0xff]
    %v332 = vld [vmem:[#allocation8 + $0x1a8] sm:$0xff]
    %v333 = vld [vmem:[#allocation8 + $0x1b0] sm:$0xff]
    %v334 = vld [vmem:[#allocation8 + $0x1b8] sm:$0xff]
    %v335 = vld [vmem:[#allocation8 + $0x1c0] sm:$0xff]
    %v336 = vld [vmem:[#allocation8 + $0x1c8] sm:$0xff]
    %v337 = vld [vmem:[#allocation8 + $0x1d0] sm:$0xff]
    %v338 = vld [vmem:[#allocation8 + $0x1d8] sm:$0xff]
    %v339 = vld [vmem:[#allocation8 + $0x1e0] sm:$0xff]
    %v340 = vld [vmem:[#allocation8 + $0x1e8] sm:$0xff]
    %v341 = vld [vmem:[#allocation8 + $0x1f0] sm:$0xff]
    %v342 = vld [vmem:[#allocation8 + $0x1f8] sm:$0xff]
    %v343 = vld [vmem:[%s5] sm:$0x3]
    %v345 = vlaneseq
    %v346 = vshrl.u32 %v345, 7
    %v347 = vsub.s32 0, %v346
    %v348 = vrot.slane %v343, %v347
    %v349 = vlaneseq
    %v350 = vshrl.u32 %v349, 7
    %v351 = vsub.s32 1, %v350
    %v352 = vrot.slane %v343, %v351
    %v419 = vunpack.c.l.b16 %v279
    %v420 = vunpack.c.h.b16 %v279
    %v421 = vunpack.c.l.b16 %v280
    %v422 = vunpack.c.h.b16 %v280
    %v423 = vunpack.c.l.b16 %v281
    %v424 = vunpack.c.h.b16 %v281
    %v425 = vunpack.c.l.b16 %v282
    %v426 = vunpack.c.h.b16 %v282
    %v427 = vunpack.c.l.b16 %v283
    %v428 = vunpack.c.h.b16 %v283
    %v429 = vunpack.c.l.b16 %v284
    %v430 = vunpack.c.h.b16 %v284
    %v431 = vunpack.c.l.b16 %v285
    %v432 = vunpack.c.h.b16 %v285
    %v433 = vunpack.c.l.b16 %v286
    %v434 = vunpack.c.h.b16 %v286
    %v435 = vunpack.c.l.b16 %v287
    %v436 = vunpack.c.h.b16 %v287
    %v437 = vunpack.c.l.b16 %v288
    %v438 = vunpack.c.h.b16 %v288
    %v439 = vunpack.c.l.b16 %v289
    %v440 = vunpack.c.h.b16 %v289
    %v441 = vunpack.c.l.b16 %v290
    %v442 = vunpack.c.h.b16 %v290
    %v443 = vunpack.c.l.b16 %v291
    %v444 = vunpack.c.h.b16 %v291
    %v445 = vunpack.c.l.b16 %v292
    %v446 = vunpack.c.h.b16 %v292
    %v447 = vunpack.c.l.b16 %v293
    %v448 = vunpack.c.h.b16 %v293
    %v449 = vunpack.c.l.b16 %v294
    %v450 = vunpack.c.h.b16 %v294
    %v451 = vunpack.c.l.b16 %v295
    %v452 = vunpack.c.h.b16 %v295
    %v453 = vunpack.c.l.b16 %v296
    %v454 = vunpack.c.h.b16 %v296
    %v455 = vunpack.c.l.b16 %v297
    %v456 = vunpack.c.h.b16 %v297
    %v457 = vunpack.c.l.b16 %v298
    %v458 = vunpack.c.h.b16 %v298
    %v459 = vunpack.c.l.b16 %v299
    %v460 = vunpack.c.h.b16 %v299
    %v461 = vunpack.c.l.b16 %v300
    %v462 = vunpack.c.h.b16 %v300
    %v463 = vunpack.c.l.b16 %v301
    %v464 = vunpack.c.h.b16 %v301
    %v465 = vunpack.c.l.b16 %v302
    %v466 = vunpack.c.h.b16 %v302
    %v467 = vunpack.c.l.b16 %v303
    %v468 = vunpack.c.h.b16 %v303
    %v469 = vunpack.c.l.b16 %v304
    %v470 = vunpack.c.h.b16 %v304
    %v471 = vunpack.c.l.b16 %v305
    %v472 = vunpack.c.h.b16 %v305
    %v473 = vunpack.c.l.b16 %v306
    %v474 = vunpack.c.h.b16 %v306
    %v475 = vunpack.c.l.b16 %v307
    %v476 = vunpack.c.h.b16 %v307
    %v477 = vunpack.c.l.b16 %v308
    %v478 = vunpack.c.h.b16 %v308
    %v479 = vunpack.c.l.b16 %v309
    %v480 = vunpack.c.h.b16 %v309
    %v481 = vunpack.c.l.b16 %v310
    %v482 = vunpack.c.h.b16 %v310
    %v483 = vunpack.c.l.b16 %v311
    %v484 = vunpack.c.h.b16 %v311
    %v485 = vunpack.c.l.b16 %v312
    %v486 = vunpack.c.h.b16 %v312
    %v487 = vunpack.c.l.b16 %v313
    %v488 = vunpack.c.h.b16 %v313
    %v489 = vunpack.c.l.b16 %v314
    %v490 = vunpack.c.h.b16 %v314
    %v491 = vunpack.c.l.b16 %v315
    %v492 = vunpack.c.h.b16 %v315
    %v493 = vunpack.c.l.b16 %v316
    %v494 = vunpack.c.h.b16 %v316
    %v495 = vunpack.c.l.b16 %v317
    %v496 = vunpack.c.h.b16 %v317
    %v497 = vunpack.c.l.b16 %v318
    %v498 = vunpack.c.h.b16 %v318
    %v499 = vunpack.c.l.b16 %v319
    %v500 = vunpack.c.h.b16 %v319
    %v501 = vunpack.c.l.b16 %v320
    %v502 = vunpack.c.h.b16 %v320
    %v503 = vunpack.c.l.b16 %v321
    %v504 = vunpack.c.h.b16 %v321
    %v505 = vunpack.c.l.b16 %v322
    %v506 = vunpack.c.h.b16 %v322
    %v507 = vunpack.c.l.b16 %v323
    %v508 = vunpack.c.h.b16 %v323
    %v509 = vunpack.c.l.b16 %v324
    %v510 = vunpack.c.h.b16 %v324
    %v511 = vunpack.c.l.b16 %v325
    %v512 = vunpack.c.h.b16 %v325
    %v513 = vunpack.c.l.b16 %v326
    %v514 = vunpack.c.h.b16 %v326
    %v515 = vunpack.c.l.b16 %v327
    %v516 = vunpack.c.h.b16 %v327
    %v517 = vunpack.c.l.b16 %v328
    %v518 = vunpack.c.h.b16 %v328
    %v519 = vunpack.c.l.b16 %v329
    %v520 = vunpack.c.h.b16 %v329
    %v521 = vunpack.c.l.b16 %v330
    %v522 = vunpack.c.h.b16 %v330
    %v523 = vunpack.c.l.b16 %v331
    %v524 = vunpack.c.h.b16 %v331
    %v525 = vunpack.c.l.b16 %v332
    %v526 = vunpack.c.h.b16 %v332
    %v527 = vunpack.c.l.b16 %v333
    %v528 = vunpack.c.h.b16 %v333
    %v529 = vunpack.c.l.b16 %v334
    %v530 = vunpack.c.h.b16 %v334
    %v531 = vunpack.c.l.b16 %v335
    %v532 = vunpack.c.h.b16 %v335
    %v533 = vunpack.c.l.b16 %v336
    %v534 = vunpack.c.h.b16 %v336
    %v535 = vunpack.c.l.b16 %v337
    %v536 = vunpack.c.h.b16 %v337
    %v537 = vunpack.c.l.b16 %v338
    %v538 = vunpack.c.h.b16 %v338
    %v539 = vunpack.c.l.b16 %v339
    %v540 = vunpack.c.h.b16 %v339
    %v541 = vunpack.c.l.b16 %v340
    %v542 = vunpack.c.h.b16 %v340
    %v543 = vunpack.c.l.b16 %v341
    %v544 = vunpack.c.h.b16 %v341
    %v545 = vunpack.c.l.b16 %v342
    %v546 = vunpack.c.h.b16 %v342
    %v547 = vpack.c.b16 %v421, %v419
    %v548 = vpack.c.b16 %v422, %v420
    %v549 = vpack.c.b16 %v425, %v423
    %v550 = vpack.c.b16 %v426, %v424
    %v551 = vpack.c.b16 %v429, %v427
    %v552 = vpack.c.b16 %v430, %v428
    %v553 = vpack.c.b16 %v433, %v431
    %v554 = vpack.c.b16 %v434, %v432
    %v555 = vpack.c.b16 %v437, %v435
    %v556 = vpack.c.b16 %v438, %v436
    %v557 = vpack.c.b16 %v441, %v439
    %v558 = vpack.c.b16 %v442, %v440
    %v559 = vpack.c.b16 %v445, %v443
    %v560 = vpack.c.b16 %v446, %v444
    %v561 = vpack.c.b16 %v449, %v447
    %v562 = vpack.c.b16 %v450, %v448
    %v563 = vpack.c.b16 %v453, %v451
    %v564 = vpack.c.b16 %v454, %v452
    %v565 = vpack.c.b16 %v457, %v455
    %v566 = vpack.c.b16 %v458, %v456
    %v567 = vpack.c.b16 %v461, %v459
    %v568 = vpack.c.b16 %v462, %v460
    %v569 = vpack.c.b16 %v465, %v463
    %v570 = vpack.c.b16 %v466, %v464
    %v571 = vpack.c.b16 %v469, %v467
    %v572 = vpack.c.b16 %v470, %v468
    %v573 = vpack.c.b16 %v473, %v471
    %v574 = vpack.c.b16 %v474, %v472
    %v575 = vpack.c.b16 %v477, %v475
    %v576 = vpack.c.b16 %v478, %v476
    %v577 = vpack.c.b16 %v481, %v479
    %v578 = vpack.c.b16 %v482, %v480
    %v579 = vpack.c.b16 %v485, %v483
    %v580 = vpack.c.b16 %v486, %v484
    %v581 = vpack.c.b16 %v489, %v487
    %v582 = vpack.c.b16 %v490, %v488
    %v583 = vpack.c.b16 %v493, %v491
    %v584 = vpack.c.b16 %v494, %v492
    %v585 = vpack.c.b16 %v497, %v495
    %v586 = vpack.c.b16 %v498, %v496
    %v587 = vpack.c.b16 %v501, %v499
    %v588 = vpack.c.b16 %v502, %v500
    %v589 = vpack.c.b16 %v505, %v503
    %v590 = vpack.c.b16 %v506, %v504
    %v591 = vpack.c.b16 %v509, %v507
    %v592 = vpack.c.b16 %v510, %v508
    %v593 = vpack.c.b16 %v513, %v511
    %v594 = vpack.c.b16 %v514, %v512
    %v595 = vpack.c.b16 %v517, %v515
    %v596 = vpack.c.b16 %v518, %v516
    %v597 = vpack.c.b16 %v521, %v519
    %v598 = vpack.c.b16 %v522, %v520
    %v599 = vpack.c.b16 %v525, %v523
    %v600 = vpack.c.b16 %v526, %v524
    %v601 = vpack.c.b16 %v529, %v527
    %v602 = vpack.c.b16 %v530, %v528
    %v603 = vpack.c.b16 %v533, %v531
    %v604 = vpack.c.b16 %v534, %v532
    %v605 = vpack.c.b16 %v537, %v535
    %v606 = vpack.c.b16 %v538, %v536
    %v607 = vpack.c.b16 %v541, %v539
    %v608 = vpack.c.b16 %v542, %v540
    %v609 = vpack.c.b16 %v545, %v543
    %v610 = vpack.c.b16 %v546, %v544
    %675 = vmatprep.subr.bf16.mxu0 %v548
    %676 = vmatpush1.bf16.msra.mxu0 %v547
    %677 = vmatprep.subr.bf16.mxu0 %v550
    %678 = vmatpush1.bf16.msra.mxu0 %v549
    %679 = vmatprep.subr.bf16.mxu0 %v552
    %680 = vmatpush1.bf16.msra.mxu0 %v551
    %681 = vmatprep.subr.bf16.mxu0 %v554
    %682 = vmatpush1.bf16.msra.mxu0 %v553
    %683 = vmatprep.subr.bf16.mxu0 %v556
    %684 = vmatpush1.bf16.msra.mxu0 %v555
    %685 = vmatprep.subr.bf16.mxu0 %v558
    %686 = vmatpush1.bf16.msra.mxu0 %v557
    %687 = vmatprep.subr.bf16.mxu0 %v560
    %688 = vmatpush1.bf16.msra.mxu0 %v559
    %689 = vmatprep.subr.bf16.mxu0 %v562
    %690 = vmatpush1.bf16.msra.mxu0 %v561
    %691 = vmatprep.subr.bf16.mxu0 %v564
    %692 = vmatpush1.bf16.msra.mxu0 %v563
    %693 = vmatprep.subr.bf16.mxu0 %v566
    %694 = vmatpush1.bf16.msra.mxu0 %v565
    %695 = vmatprep.subr.bf16.mxu0 %v568
    %696 = vmatpush1.bf16.msra.mxu0 %v567
    %697 = vmatprep.subr.bf16.mxu0 %v570
    %698 = vmatpush1.bf16.msra.mxu0 %v569
    %699 = vmatprep.subr.bf16.mxu0 %v572
    %700 = vmatpush1.bf16.msra.mxu0 %v571
    %701 = vmatprep.subr.bf16.mxu0 %v574
    %702 = vmatpush1.bf16.msra.mxu0 %v573
    %703 = vmatprep.subr.bf16.mxu0 %v576
    %704 = vmatpush1.bf16.msra.mxu0 %v575
    %705 = vmatprep.subr.bf16.mxu0 %v578
    %706 = vmatpush1.bf16.msra.mxu0 %v577
    %707 = vmatprep.mubr.bf16.mxu0 %v276
    %708 = vmatmul.mubr.bf16.gmra.mrb[0].mxu0 %v275
    %v709 = vpop.f32.mrb[0].mxu0
    %v710 = vadd.f32 %v348, %v709
    %v711 = vpop.f32.mrb[0].mxu0
    %v712 = vadd.f32 %v352, %v711
    %v713 = vpop.f32.mrb[0].mxu0
    %v714 = vadd.f32 %v348, %v713
    %v715 = vpop.f32.mrb[0].mxu0
    %v716 = vadd.f32 %v352, %v715
    %717 = vdwg.mxu0
    %718 = vmatprep.subr.bf16.mxu0 %v580
    %719 = vmatpush1.bf16.msra.mxu0 %v579
    %720 = vmatprep.subr.bf16.mxu0 %v582
    %721 = vmatpush1.bf16.msra.mxu0 %v581
    %722 = vmatprep.subr.bf16.mxu0 %v584
    %723 = vmatpush1.bf16.msra.mxu0 %v583
    %724 = vmatprep.subr.bf16.mxu0 %v586
    %725 = vmatpush1.bf16.msra.mxu0 %v585
    %726 = vmatprep.subr.bf16.mxu0 %v588
    %727 = vmatpush1.bf16.msra.mxu0 %v587
    %728 = vmatprep.subr.bf16.mxu0 %v590
    %729 = vmatpush1.bf16.msra.mxu0 %v589
    %730 = vmatprep.subr.bf16.mxu0 %v592
    %731 = vmatpush1.bf16.msra.mxu0 %v591
    %732 = vmatprep.subr.bf16.mxu0 %v594
    %733 = vmatpush1.bf16.msra.mxu0 %v593
    %734 = vmatprep.subr.bf16.mxu0 %v596
    %735 = vmatpush1.bf16.msra.mxu0 %v595
    %736 = vmatprep.subr.bf16.mxu0 %v598
    %737 = vmatpush1.bf16.msra.mxu0 %v597
    %738 = vmatprep.subr.bf16.mxu0 %v600
    %739 = vmatpush1.bf16.msra.mxu0 %v599
    %740 = vmatprep.subr.bf16.mxu0 %v602
    %741 = vmatpush1.bf16.msra.mxu0 %v601
    %742 = vmatprep.subr.bf16.mxu0 %v604
    %743 = vmatpush1.bf16.msra.mxu0 %v603
    %744 = vmatprep.subr.bf16.mxu0 %v606
    %745 = vmatpush1.bf16.msra.mxu0 %v605
    %746 = vmatprep.subr.bf16.mxu0 %v608
    %747 = vmatpush1.bf16.msra.mxu0 %v607
    %748 = vmatprep.subr.bf16.mxu0 %v610
    %749 = vmatpush1.bf16.msra.mxu0 %v609
    %750 = vmatprep.mubr.bf16.mxu0 %v278
    %751 = vmatmul.mubr.bf16.gmra.mrb[0].mxu0 %v277
    %v752 = vpop.f32.mrb[0].mxu0
    %v753 = vadd.f32 %v710, %v752
    %v754 = vpop.f32.mrb[0].mxu0
    %v755 = vadd.f32 %v712, %v754
    %v756 = vpop.f32.mrb[0].mxu0
    %v757 = vadd.f32 %v714, %v756
    %v758 = vpop.f32.mrb[0].mxu0
    %v759 = vadd.f32 %v716, %v758
    %760 = vdwg.mxu0
    %v761 = vmax.f32 %v753, 0.0
    %v762 = vmax.f32 %v755, 0.0
    %v763 = vmax.f32 %v757, 0.0
    %v764 = vmax.f32 %v759, 0.0
    %v765 = vpack.c.bf16 %v763, %v761
    %v766 = vpack.c.bf16 %v764, %v762
    %v767 = vld [vmem:[#allocation10] sm:$0xf]
    %v768 = vld [vmem:[#allocation10 + $0x4] sm:$0xf]
    %v769 = vld [vmem:[#allocation10 + $0x8] sm:$0xf]
    %v770 = vld [vmem:[#allocation10 + $0xc] sm:$0xf]
    %v771 = vld [vmem:[#allocation10 + $0x10] sm:$0xf]
    %v772 = vld [vmem:[#allocation10 + $0x14] sm:$0xf]
    %v773 = vld [vmem:[#allocation10 + $0x18] sm:$0xf]
    %v774 = vld [vmem:[#allocation10 + $0x1c] sm:$0xf]
    %v775 = vld [vmem:[#allocation10 + $0x20] sm:$0xf]
    %v776 = vld [vmem:[#allocation10 + $0x24] sm:$0xf]
    %v777 = vld [vmem:[#allocation10 + $0x28] sm:$0xf]
    %v778 = vld [vmem:[#allocation10 + $0x2c] sm:$0xf]
    %v779 = vld [vmem:[#allocation10 + $0x30] sm:$0xf]
    %v780 = vld [vmem:[#allocation10 + $0x34] sm:$0xf]
    %v781 = vld [vmem:[#allocation10 + $0x38] sm:$0xf]
    %v782 = vld [vmem:[#allocation10 + $0x3c] sm:$0xf]
    %v783 = vld [vmem:[#allocation10 + $0x40] sm:$0xf]
    %v784 = vld [vmem:[#allocation10 + $0x44] sm:$0xf]
    %v785 = vld [vmem:[#allocation10 + $0x48] sm:$0xf]
    %v786 = vld [vmem:[#allocation10 + $0x4c] sm:$0xf]
    %v787 = vld [vmem:[#allocation10 + $0x50] sm:$0xf]
    %v788 = vld [vmem:[#allocation10 + $0x54] sm:$0xf]
    %v789 = vld [vmem:[#allocation10 + $0x58] sm:$0xf]
    %v790 = vld [vmem:[#allocation10 + $0x5c] sm:$0xf]
    %v791 = vld [vmem:[#allocation10 + $0x60] sm:$0xf]
    %v792 = vld [vmem:[#allocation10 + $0x64] sm:$0xf]
    %v793 = vld [vmem:[#allocation10 + $0x68] sm:$0xf]
    %v794 = vld [vmem:[#allocation10 + $0x6c] sm:$0xf]
    %v795 = vld [vmem:[#allocation10 + $0x70] sm:$0xf]
    %v796 = vld [vmem:[#allocation10 + $0x74] sm:$0xf]
    %v797 = vld [vmem:[#allocation10 + $0x78] sm:$0xf]
    %v798 = vld [vmem:[#allocation10 + $0x7c] sm:$0xf]
    %v799 = vld [vmem:[%s7] sm:$0x1]
    %v801 = vlaneseq
    %v802 = vshrl.u32 %v801, 7
    %v803 = vsub.s32 0, %v802
    %v804 = vrot.slane %v799, %v803
    %v838 = vunpack.c.l.b16 %v767
    %v839 = vunpack.c.l.b16 %v768
    %v840 = vunpack.c.l.b16 %v769
    %v841 = vunpack.c.l.b16 %v770
    %v842 = vunpack.c.l.b16 %v771
    %v843 = vunpack.c.l.b16 %v772
    %v844 = vunpack.c.l.b16 %v773
    %v845 = vunpack.c.l.b16 %v774
    %v846 = vunpack.c.l.b16 %v775
    %v847 = vunpack.c.l.b16 %v776
    %v848 = vunpack.c.l.b16 %v777
    %v849 = vunpack.c.l.b16 %v778
    %v850 = vunpack.c.l.b16 %v779
    %v851 = vunpack.c.l.b16 %v780
    %v852 = vunpack.c.l.b16 %v781
    %v853 = vunpack.c.l.b16 %v782
    %v854 = vunpack.c.l.b16 %v783
    %v855 = vunpack.c.l.b16 %v784
    %v856 = vunpack.c.l.b16 %v785
    %v857 = vunpack.c.l.b16 %v786
    %v858 = vunpack.c.l.b16 %v787
    %v859 = vunpack.c.l.b16 %v788
    %v860 = vunpack.c.l.b16 %v789
    %v861 = vunpack.c.l.b16 %v790
    %v862 = vunpack.c.l.b16 %v791
    %v863 = vunpack.c.l.b16 %v792
    %v864 = vunpack.c.l.b16 %v793
    %v865 = vunpack.c.l.b16 %v794
    %v866 = vunpack.c.l.b16 %v795
    %v867 = vunpack.c.l.b16 %v796
    %v868 = vunpack.c.l.b16 %v797
    %v869 = vunpack.c.l.b16 %v798
    %v870 = vpack.c.b16 %v839, %v838
    %v871 = vpack.c.b16 %v841, %v840
    %v872 = vpack.c.b16 %v843, %v842
    %v873 = vpack.c.b16 %v845, %v844
    %v874 = vpack.c.b16 %v847, %v846
    %v875 = vpack.c.b16 %v849, %v848
    %v876 = vpack.c.b16 %v851, %v850
    %v877 = vpack.c.b16 %v853, %v852
    %v878 = vpack.c.b16 %v855, %v854
    %v879 = vpack.c.b16 %v857, %v856
    %v880 = vpack.c.b16 %v859, %v858
    %v881 = vpack.c.b16 %v861, %v860
    %v882 = vpack.c.b16 %v863, %v862
    %v883 = vpack.c.b16 %v865, %v864
    %v884 = vpack.c.b16 %v867, %v866
    %v885 = vpack.c.b16 %v869, %v868
    %902 = vmatprep.subr.bf16.mxu0 0
    %903 = vmatpush1.bf16.msra.mxu0 %v870
    %904 = vmatprep.subr.bf16.mxu0 0
    %905 = vmatpush1.bf16.msra.mxu0 %v871
    %906 = vmatprep.subr.bf16.mxu0 0
    %907 = vmatpush1.bf16.msra.mxu0 %v872
    %908 = vmatprep.subr.bf16.mxu0 0
    %909 = vmatpush1.bf16.msra.mxu0 %v873
    %910 = vmatprep.subr.bf16.mxu0 0
    %911 = vmatpush1.bf16.msra.mxu0 %v874
    %912 = vmatprep.subr.bf16.mxu0 0
    %913 = vmatpush1.bf16.msra.mxu0 %v875
    %914 = vmatprep.subr.bf16.mxu0 0
    %915 = vmatpush1.bf16.msra.mxu0 %v876
    %916 = vmatprep.subr.bf16.mxu0 0
    %917 = vmatpush1.bf16.msra.mxu0 %v877
    %918 = vmatprep.subr.bf16.mxu0 0
    %919 = vmatpush1.bf16.msra.mxu0 %v878
    %920 = vmatprep.subr.bf16.mxu0 0
    %921 = vmatpush1.bf16.msra.mxu0 %v879
    %922 = vmatprep.subr.bf16.mxu0 0
    %923 = vmatpush1.bf16.msra.mxu0 %v880
    %924 = vmatprep.subr.bf16.mxu0 0
    %925 = vmatpush1.bf16.msra.mxu0 %v881
    %926 = vmatprep.subr.bf16.mxu0 0
    %927 = vmatpush1.bf16.msra.mxu0 %v882
    %928 = vmatprep.subr.bf16.mxu0 0
    %929 = vmatpush1.bf16.msra.mxu0 %v883
    %930 = vmatprep.subr.bf16.mxu0 0
    %931 = vmatpush1.bf16.msra.mxu0 %v884
    %932 = vmatprep.subr.bf16.mxu0 0
    %933 = vmatpush1.bf16.msra.mxu0 %v885
    %934 = vmatprep.mubr.bf16.mxu0 %v766
    %935 = vmatmul.mubr.bf16.gmra.mrb[0].mxu0 %v765
    %v936 = vpop.f32.mrb[0].mxu0
    %v937 = vadd.f32 %v804, %v936
    %v938 = vpop.f32.mrb[0].mxu0
    %v939 = vpop.f32.mrb[0].mxu0
    %v940 = vadd.f32 %v804, %v939
    %v941 = vpop.f32.mrb[0].mxu0
    %942 = vdwg.mxu0
    %v943 = vmax.f32 %v937, 0.0
    %v944 = vmax.f32 %v940, 0.0
    %v945 = vpack.c.bf16 %v944, %v943
    %v947 = vrot.slane %v945, 4
    %v949 = vsub.bf16 %v945, %v947
    %v950 = vld [vmem:[%s8] sm:$0x1]
    %951 = vmatprep.subr.bf16.mxu0 0
    %952 = vmatpush1.bf16.xpose.msra.mxu0 %v949
    %953 = vmatprep.subr.bf16.mxu0 0
    %954 = vmatpush1.bf16.xpose.msra.mxu0 0
    %955 = vmatprep.subr.bf16.mxu0 0
    %956 = vmatpush1.bf16.xpose.msra.mxu0 0
    %957 = vmatprep.subr.bf16.mxu0 0
    %958 = vmatpush1.bf16.xpose.msra.mxu0 0
    %959 = vmatprep.subr.bf16.mxu0 0
    %960 = vmatpush1.bf16.xpose.msra.mxu0 0
    %961 = vmatprep.subr.bf16.mxu0 0
    %962 = vmatpush1.bf16.xpose.msra.mxu0 0
    %963 = vmatprep.subr.bf16.mxu0 0
    %964 = vmatpush1.bf16.xpose.msra.mxu0 0
    %965 = vmatprep.subr.bf16.mxu0 0
    %966 = vmatpush1.bf16.xpose.msra.mxu0 0
    %967 = vmatprep.subr.bf16.mxu0 0
    %968 = vmatpush1.bf16.xpose.msra.mxu0 0
    %969 = vmatprep.subr.bf16.mxu0 0
    %970 = vmatpush1.bf16.xpose.msra.mxu0 0
    %971 = vmatprep.subr.bf16.mxu0 0
    %972 = vmatpush1.bf16.xpose.msra.mxu0 0
    %973 = vmatprep.subr.bf16.mxu0 0
    %974 = vmatpush1.bf16.xpose.msra.mxu0 0
    %975 = vmatprep.subr.bf16.mxu0 0
    %976 = vmatpush1.bf16.xpose.msra.mxu0 0
    %977 = vmatprep.subr.bf16.mxu0 0
    %978 = vmatpush1.bf16.xpose.msra.mxu0 0
    %979 = vmatprep.subr.bf16.mxu0 0
    %980 = vmatpush1.bf16.xpose.msra.mxu0 0
    %981 = vmatprep.subr.bf16.mxu0 0
    %982 = vmatpush1.bf16.xpose.msra.mxu0 0
    %983 = vmatprep.mubr.bf16.mxu0 0
    %984 = vmatmul.mubr.bf16.gmra.mrb[0].mxu0 %v950
    %v985 = vpop.f32.mrb[0].mxu0
    %v986 = vadd.f32 0.0, %v985
    %v987 = vpop.f32.mrb[0].mxu0
    %v988 = vpop.f32.mrb[0].mxu0
    %v989 = vpop.f32.mrb[0].mxu0
    %990 = vdwg.mxu0
    %vm991 = vcmp.ge.f32.partialorder %v986, 0.0
    %v992 = vsub.f32 0.0, %v986
    %v993 = vsel %vm991, %v992, %v986
    %v994 = vmul.f32 %v993, 1.442695
    %v995 = vpow.pop %v994
    %v996 = vadd.f32 %v995, 1.0
    %v997 = vrcp.pop %v996
    %v998 = vmul.f32 1.0, %v997
    %v999 = vmul.f32 %v995, %v997
    %v1000 = vsel %vm991, %v998, %v999
    %vm1001 = vcmask 57344
    %1002 = vst.msk [vmem:[#allocation11] sm:$0x1] %vm1001, %v1000
    // Predicated region
    $region58: #{tpu_custom_call.1} parent=1 // pred_check
      _
    $region59: #{tpu_custom_call.1} parent=1 // pred_check_branch
      %1004 = sbr.rel (0) target = $region61
    $region60: #{tpu_custom_call.1} parent=1 // pred_region
      %s1006 = ssub.s32 16, 16
      %1007 = vsyncadd [#allocation4], %s1006
      %s1009 = sshll.u32 [#allocation11], 4
      %s1010 = int_to_ptr.vmem [resolvable:$true] %s1009
      %1012 = dma.vmem_to_hbm [thread:$0]  %s1010, 16, %s9, [#allocation4]
    $region61: #{tpu_custom_call.1} parent=1 // pred_fallthru
      _
    // Predicated region
    $region62: #{tpu_custom_call.1} parent=1 // pred_check
      _
    $region63: #{tpu_custom_call.1} parent=1 // pred_check_branch
      %1014 = sbr.rel (0) target = $region65
    $region64: #{tpu_custom_call.1} parent=1 // pred_region
      %1015 = dma.done [#allocation4], 16
    $region65: #{tpu_custom_call.1} parent=1 // pred_fallthru
      _
    %1016 = vsyncpa [#allocation3], 1
    %1017 = vsyncpa [#allocation6], 1
    %1018 = vsyncpa [#allocation9], 1
    %1019 = vsyncpa [#allocation4], 1

</llo_original>
